<compile_context>
chip_gen: v6e
topology: v6e:2x2x1
jax: 0.10.0
libtpu: 0.0.40
codegen_flags: <defaults>
</compile_context>

<pallas_src>
import math

import jax
import jax.numpy as jnp
from jax.experimental import pallas as pl
from jax.experimental.pallas import tpu as pltpu

DIM = 6
ORDER = 2
NUM_C = math.comb(DIM + ORDER, ORDER)  # 28, matches order_mat.size(0)

FPAD = 128       # padded feature width (lanes)
INPAD = 8        # padded input width for layer 0 (one sublane)
NLAYERS = 6
LAYER_DIMS = [(DIM, 64), (64, 128), (128, 128), (128, 128), (128, 128), (128, NUM_C)]


def _round_up(n, m):
    return ((n + m - 1) // m) * m


def _choose_tb(batch):
    """Batch tile size.

    Aim for >= 2 grid steps whenever possible (v7x shards the 'parallel'
    batch axis across its 2 TensorCores), with tiles up to 1024 rows to
    amortize the ~0.35 us per-grid-step overhead on all generations.
    """
    b8 = _round_up(max(batch, 8), 8)
    if b8 <= 16:
        return b8                       # too small to split usefully
    return min(1024, _round_up((b8 + 1) // 2, 8))


def _pad2(a, rows, cols):
    return jnp.pad(a, ((0, rows - a.shape[0]), (0, cols - a.shape[1])))


def prepare_params(params, weight_dtype=jnp.bfloat16):
    """Pack per-layer (W[in,out], b[out]) into the kernel's operands ONCE.

    Returns (w_stack, b_stack):
      w_stack: (6, 128, 128) weight_dtype  (each layer zero-padded to 128x128;
               layer 0 only uses rows 0..5)
      b_stack: (8, 128) float32            (rows 0..5 used, zero elsewhere)

    Hoisted out of the forward path so the pad/stack/scatter XLA ops run once
    instead of on every call.
    """
    w_stack = jnp.stack(
        [_pad2(w.astype(jnp.float32), FPAD, FPAD) for (w, _) in params]
    ).astype(weight_dtype)
    b_stack = jnp.zeros((8, FPAD), jnp.float32)
    for l, (_, b) in enumerate(params):
        b_stack = b_stack.at[l, : b.shape[0]].set(b.astype(jnp.float32))
    return w_stack, b_stack


def _mlp_kernel(x_ref, w_ref, b_ref, o_ref):
    """Entire 6-layer MLP for one (TB, *) batch tile, all weights in VMEM.

    x_ref: (TB, 8)   f32          (real fan-in 6, zero-padded to 8)
    w_ref: (6, 128, 128) compute-dtype (f32 or bf16)
    b_ref: (8, 128)  f32
    o_ref: (TB, 128) f32
    """
    cdt = w_ref.dtype                       # compute dtype for MXU inputs
    b_all = b_ref[...]                      # (8, 128) f32, one vreg

    # Layer 0: K=8 contraction (sublane-aligned slice of the padded weight)
    # instead of padding the input to 128 lanes.
    h = jnp.dot(x_ref[...].astype(cdt), w_ref[0][:INPAD, :],
                preferred_element_type=jnp.float32) + b_all[0:1, :]
    h = jnp.maximum(h, 0.0)

    # Layers 1..5: lane-dense 128x128 MXU tiles, unrolled at trace time.
    for l in range(1, NLAYERS):
        h = jnp.dot(h.astype(cdt), w_ref[l],
                    preferred_element_type=jnp.float32) + b_all[l:l + 1, :]
        if l < NLAYERS - 1:
            h = jnp.maximum(h, 0.0)

    o_ref[...] = h                          # lane-dense 128-wide store


def net_c_forward(x, w_stack, b_stack):
    """x: (B, DIM) float32.  (w_stack, b_stack) from prepare_params().

    Returns (B, NUM_C) float32.
    """
    B = x.shape[0]
    TB = _choose_tb(B)
    B_pad = _round_up(B, TB)

    # Only pad batch rows and 6 -> 8 input lanes (32 B/row in HBM, not 512 B).
    x_p = jnp.pad(x.astype(jnp.float32), ((0, B_pad - B), (0, INPAD - DIM)))

    out_p = pl.pallas_call(
        _mlp_kernel,
        out_shape=jax.ShapeDtypeStruct((B_pad, FPAD), jnp.float32),
        grid_spec=pltpu.PrefetchScalarGridSpec(
            num_scalar_prefetch=0,
            grid=(B_pad // TB,),
            in_specs=[
                # x tile: last dim (8) equals the full array dim -> legal block.
                pl.BlockSpec((TB, INPAD), lambda i: (i, 0)),
                # Weights / biases replicated across the grid (constant index
                # map).  Default double-buffering kept: ~0.4 MiB extra VMEM is
                # negligible even at TB=1024 on v7x's 64 MiB VMEM.
                pl.BlockSpec((NLAYERS, FPAD, FPAD), lambda i: (0, 0, 0)),
                pl.BlockSpec((8, FPAD), lambda i: (0, 0)),
            ],
            out_specs=pl.BlockSpec((TB, FPAD), lambda i: (i, 0)),
        ),
        compiler_params=pltpu.CompilerParams(
            dimension_semantics=("parallel",)),
    )(x_p, w_stack, b_stack)

    # Keep the kernel's store lane-dense; trim rows/cols outside the kernel.
    return out_p[:B, :NUM_C]


def init_params(key):
    """Deterministic init mimicking torch.nn.Linear (uniform +-1/sqrt(fan_in))."""
    params = []
    for (fan_in, fan_out) in LAYER_DIMS:
        key, kw, kb = jax.random.split(key, 3)
        bound = 1.0 / math.sqrt(fan_in)
        w = jax.random.uniform(kw, (fan_in, fan_out), jnp.float32, -bound, bound)
        b = jax.random.uniform(kb, (fan_out,), jnp.float32, -bound, bound)
        params.append((w, b))
    return params


def _reference(x, params):
    h = x
    for i, (w, b) in enumerate(params):
        h = h @ w + b
        if i < len(params) - 1:
            h = jnp.maximum(h, 0.0)
    return h


if __name__ == "__main__":
    key = jax.random.PRNGKey(0)
    key, kx = jax.random.split(key)
    params = init_params(key)

    # --- f32 compute path: tight correctness check at small batch ----------
    w32, b32 = prepare_params(params, weight_dtype=jnp.float32)
    B = 8
    x = jax.random.normal(kx, (B, DIM), jnp.float32)
    out = jax.block_until_ready(net_c_forward(x, w32, b32))
    ref = _reference(x, params)
    assert out.shape == (B, NUM_C), out.shape
    assert jnp.allclose(out, ref, atol=1e-4, rtol=1e-4), \
        float(jnp.abs(out - ref).max())

    # --- default bf16 compute path, multi-step grid, padded batch ----------
    wbf, bbf = prepare_params(params)            # bf16 weights (default)
    B2 = 300                                     # not a multiple of the tile
    x2 = jax.random.normal(jax.random.PRNGKey(1), (B2, DIM), jnp.float32)
    out2 = jax.block_until_ready(net_c_forward(x2, wbf, bbf))
    ref2 = _reference(x2, params)
    assert out2.shape == (B2, NUM_C), out2.shape
    # bf16 MXU inputs with f32 accumulation: documented 5e-2 tolerance.
    assert jnp.allclose(out2, ref2, atol=5e-2, rtol=5e-2), \
        float(jnp.abs(out2 - ref2).max())

    print("KERNEL_OK")
</pallas_src>

<mosaic_0001>
module attributes {stable_mosaic.version = 11 : i64} {
  func.func @_mlp_kernel(%arg0: i32, %arg1: memref<8x8xf32, #tpu.memory_space<vmem>>, %arg2: memref<6x128x128xf32, #tpu.memory_space<vmem>>, %arg3: memref<8x128xf32, #tpu.memory_space<vmem>>, %arg4: memref<8x128xf32, #tpu.memory_space<vmem>>) attributes {dimension_semantics = [#tpu.dimension_semantics<parallel>], iteration_bounds = array<i64: 1>, scalar_prefetch = 0 : i64, scratch_operands = 0 : i64, tpu.core_type = #tpu.core_type<tc>, window_params = [{transform_indices = @transform_0, window_bounds = array<i64: 8, 8>}, {pipeline_mode = #tpu.pipeline_mode<synchronous>, transform_indices = @transform_1, window_bounds = array<i64: 6, 128, 128>}, {pipeline_mode = #tpu.pipeline_mode<synchronous>, transform_indices = @transform_2, window_bounds = array<i64: 8, 128>}, {transform_indices = @transform_3, window_bounds = array<i64: 8, 128>}]} {
    %c0 = arith.constant 0 : index
    %c0_0 = arith.constant 0 : index
    %0 = vector.load %arg3[%c0, %c0_0] : memref<8x128xf32, #tpu.memory_space<vmem>>, vector<8x128xf32>
    %c0_1 = arith.constant 0 : index
    %c0_2 = arith.constant 0 : index
    %1 = vector.load %arg1[%c0_1, %c0_2] : memref<8x8xf32, #tpu.memory_space<vmem>>, vector<8x8xf32>
    %c0_3 = arith.constant 0 : index
    %c0_4 = arith.constant 0 : index
    %c0_5 = arith.constant 0 : index
    %2 = vector.load %arg2[%c0_3, %c0_4, %c0_5] : memref<6x128x128xf32, #tpu.memory_space<vmem>>, vector<1x128x128xf32>
    %3 = vector.shape_cast %2 : vector<1x128x128xf32> to vector<128x128xf32>
    %4 = vector.extract_strided_slice %3 {offsets = [0, 0], sizes = [8, 128], strides = [1, 1]} : vector<128x128xf32> to vector<8x128xf32>
    %cst = arith.constant dense<0.000000e+00> : vector<8x128xf32>
    %5 = tpu.matmul %1, %4, %cst {dimension_numbers = #tpu.dot_dimension_numbers<[1], [0], [0], [1], [0, 0, 1, 1], [], []>} : vector<8x8xf32>, vector<8x128xf32>, vector<8x128xf32> -> vector<8x128xf32>
    %6 = vector.extract_strided_slice %0 {offsets = [0, 0], sizes = [1, 128], strides = [1, 1]} : vector<8x128xf32> to vector<1x128xf32>
    %7 = vector.broadcast %6 : vector<1x128xf32> to vector<8x128xf32>
    %8 = arith.addf %5, %7 : vector<8x128xf32>
    %cst_6 = arith.constant 0.000000e+00 : f32
    %9 = vector.broadcast %cst_6 : f32 to vector<8x128xf32>
    %10 = arith.maximumf %8, %9 : vector<8x128xf32>
    %c1 = arith.constant 1 : index
    %c0_7 = arith.constant 0 : index
    %c0_8 = arith.constant 0 : index
    %11 = vector.load %arg2[%c1, %c0_7, %c0_8] : memref<6x128x128xf32, #tpu.memory_space<vmem>>, vector<1x128x128xf32>
    %12 = vector.shape_cast %11 : vector<1x128x128xf32> to vector<128x128xf32>
    %cst_9 = arith.constant dense<0.000000e+00> : vector<8x128xf32>
    %13 = tpu.matmul %10, %12, %cst_9 {dimension_numbers = #tpu.dot_dimension_numbers<[1], [0], [0], [1], [0, 0, 1, 1], [], []>} : vector<8x128xf32>, vector<128x128xf32>, vector<8x128xf32> -> vector<8x128xf32>
    %14 = vector.extract_strided_slice %0 {offsets = [1, 0], sizes = [1, 128], strides = [1, 1]} : vector<8x128xf32> to vector<1x128xf32>
    %15 = vector.broadcast %14 : vector<1x128xf32> to vector<8x128xf32>
    %16 = arith.addf %13, %15 : vector<8x128xf32>
    %cst_10 = arith.constant 0.000000e+00 : f32
    %17 = vector.broadcast %cst_10 : f32 to vector<8x128xf32>
    %18 = arith.maximumf %16, %17 : vector<8x128xf32>
    %c2 = arith.constant 2 : index
    %c0_11 = arith.constant 0 : index
    %c0_12 = arith.constant 0 : index
    %19 = vector.load %arg2[%c2, %c0_11, %c0_12] : memref<6x128x128xf32, #tpu.memory_space<vmem>>, vector<1x128x128xf32>
    %20 = vector.shape_cast %19 : vector<1x128x128xf32> to vector<128x128xf32>
    %cst_13 = arith.constant dense<0.000000e+00> : vector<8x128xf32>
    %21 = tpu.matmul %18, %20, %cst_13 {dimension_numbers = #tpu.dot_dimension_numbers<[1], [0], [0], [1], [0, 0, 1, 1], [], []>} : vector<8x128xf32>, vector<128x128xf32>, vector<8x128xf32> -> vector<8x128xf32>
    %22 = vector.extract_strided_slice %0 {offsets = [2, 0], sizes = [1, 128], strides = [1, 1]} : vector<8x128xf32> to vector<1x128xf32>
    %23 = vector.broadcast %22 : vector<1x128xf32> to vector<8x128xf32>
    %24 = arith.addf %21, %23 : vector<8x128xf32>
    %cst_14 = arith.constant 0.000000e+00 : f32
    %25 = vector.broadcast %cst_14 : f32 to vector<8x128xf32>
    %26 = arith.maximumf %24, %25 : vector<8x128xf32>
    %c3 = arith.constant 3 : index
    %c0_15 = arith.constant 0 : index
    %c0_16 = arith.constant 0 : index
    %27 = vector.load %arg2[%c3, %c0_15, %c0_16] : memref<6x128x128xf32, #tpu.memory_space<vmem>>, vector<1x128x128xf32>
    %28 = vector.shape_cast %27 : vector<1x128x128xf32> to vector<128x128xf32>
    %cst_17 = arith.constant dense<0.000000e+00> : vector<8x128xf32>
    %29 = tpu.matmul %26, %28, %cst_17 {dimension_numbers = #tpu.dot_dimension_numbers<[1], [0], [0], [1], [0, 0, 1, 1], [], []>} : vector<8x128xf32>, vector<128x128xf32>, vector<8x128xf32> -> vector<8x128xf32>
    %30 = vector.extract_strided_slice %0 {offsets = [3, 0], sizes = [1, 128], strides = [1, 1]} : vector<8x128xf32> to vector<1x128xf32>
    %31 = vector.broadcast %30 : vector<1x128xf32> to vector<8x128xf32>
    %32 = arith.addf %29, %31 : vector<8x128xf32>
    %cst_18 = arith.constant 0.000000e+00 : f32
    %33 = vector.broadcast %cst_18 : f32 to vector<8x128xf32>
    %34 = arith.maximumf %32, %33 : vector<8x128xf32>
    %c4 = arith.constant 4 : index
    %c0_19 = arith.constant 0 : index
    %c0_20 = arith.constant 0 : index
    %35 = vector.load %arg2[%c4, %c0_19, %c0_20] : memref<6x128x128xf32, #tpu.memory_space<vmem>>, vector<1x128x128xf32>
    %36 = vector.shape_cast %35 : vector<1x128x128xf32> to vector<128x128xf32>
    %cst_21 = arith.constant dense<0.000000e+00> : vector<8x128xf32>
    %37 = tpu.matmul %34, %36, %cst_21 {dimension_numbers = #tpu.dot_dimension_numbers<[1], [0], [0], [1], [0, 0, 1, 1], [], []>} : vector<8x128xf32>, vector<128x128xf32>, vector<8x128xf32> -> vector<8x128xf32>
    %38 = vector.extract_strided_slice %0 {offsets = [4, 0], sizes = [1, 128], strides = [1, 1]} : vector<8x128xf32> to vector<1x128xf32>
    %39 = vector.broadcast %38 : vector<1x128xf32> to vector<8x128xf32>
    %40 = arith.addf %37, %39 : vector<8x128xf32>
    %cst_22 = arith.constant 0.000000e+00 : f32
    %41 = vector.broadcast %cst_22 : f32 to vector<8x128xf32>
    %42 = arith.maximumf %40, %41 : vector<8x128xf32>
    %c5 = arith.constant 5 : index
    %c0_23 = arith.constant 0 : index
    %c0_24 = arith.constant 0 : index
    %43 = vector.load %arg2[%c5, %c0_23, %c0_24] : memref<6x128x128xf32, #tpu.memory_space<vmem>>, vector<1x128x128xf32>
    %44 = vector.shape_cast %43 : vector<1x128x128xf32> to vector<128x128xf32>
    %cst_25 = arith.constant dense<0.000000e+00> : vector<8x128xf32>
    %45 = tpu.matmul %42, %44, %cst_25 {dimension_numbers = #tpu.dot_dimension_numbers<[1], [0], [0], [1], [0, 0, 1, 1], [], []>} : vector<8x128xf32>, vector<128x128xf32>, vector<8x128xf32> -> vector<8x128xf32>
    %46 = vector.extract_strided_slice %0 {offsets = [5, 0], sizes = [1, 128], strides = [1, 1]} : vector<8x128xf32> to vector<1x128xf32>
    %47 = vector.broadcast %46 : vector<1x128xf32> to vector<8x128xf32>
    %48 = arith.addf %45, %47 : vector<8x128xf32>
    %c0_26 = arith.constant 0 : index
    %c0_27 = arith.constant 0 : index
    %49 = vector.load %arg4[%c0_26, %c0_27] : memref<8x128xf32, #tpu.memory_space<vmem>>, vector<8x128xf32>
    tpu.vector_store %arg4[%c0_26, %c0_27], %48 {strides = array<i32>} : memref<8x128xf32, #tpu.memory_space<vmem>>, vector<8x128xf32>,
    return
  }
  func.func @transform_0(%arg0: i32) -> (i32, i32) {
    %c0_i32 = arith.constant 0 : i32
    %c0_i32_0 = arith.constant 0 : i32
    return %arg0, %c0_i32 : i32, i32
  }
  func.func @transform_1(%arg0: i32) -> (i32, i32, i32) {
    %c0_i32 = arith.constant 0 : i32
    %c0_i32_0 = arith.constant 0 : i32
    %c0_i32_1 = arith.constant 0 : i32
    %c0_i32_2 = arith.constant 0 : i32
    return %c0_i32, %c0_i32_0, %c0_i32_1 : i32, i32, i32
  }
  func.func @transform_2(%arg0: i32) -> (i32, i32) {
    %c0_i32 = arith.constant 0 : i32
    %c0_i32_0 = arith.constant 0 : i32
    %c0_i32_1 = arith.constant 0 : i32
    return %c0_i32, %c0_i32_0 : i32, i32
  }
  func.func @transform_3(%arg0: i32) -> (i32, i32) {
    %c0_i32 = arith.constant 0 : i32
    %c0_i32_0 = arith.constant 0 : i32
    return %arg0, %c0_i32 : i32, i32
  }
}

</mosaic_0001>

<llo_original>
// kernel: tpu_custom_call.1
$region0: #{tpu_custom_call.1}
  #allocation0 [shape = 'u32[]', space=smem, size = 0x4, offset = 0x4, fixed_abs, tag = 'smem constant byte address 0x4 - core index']
  #allocation1 [shape = 'u32[144,128]{1,0:T(1,128)}', space=vmem, size = 0x12000, scoped, tag = 'internal scratch']
  %s0 = inlined_call_operand.hbm [shape: f32[8,8], index: 0, kind: input, shape index: {}]
  %s1 = inlined_call_operand.hbm [shape: f32[6,128,128], index: 1, kind: input, shape index: {}]
  %s2 = inlined_call_operand.hbm [shape: f32[8,128], index: 2, kind: input, shape index: {}]
  %s3 = inlined_call_operand.hbm [shape: f32[8,128], index: 3, kind: output, shape index: {}]
  %s4 = sld [smem:[#allocation0]]
  $region34: #{tpu_custom_call.1} parent=0
    _
  %s6 = ssub.s32 1, %s4
  %s7 = scalar_select 0, %s6, %s4
  $region1: #{tpu_custom_call.1} parent=0
    #allocation2 [shape = 'u8[4096]{0}', space=vmem, size = 0x1000, scoped, tag = 'input window, operand 0, single buffered']
    #allocation3 [shape = 's32[1]{0}', space=sflag, size = 0x4, scoped, tag = 'scoped memory for tpu_custom_call.1']
    #allocation4 [shape = 's32[1]{0}', space=sflag, size = 0x4, scoped, tag = 'scoped memory for tpu_custom_call.1']
    #allocation5 [shape = 'u8[393216]{0}', space=vmem, size = 0x60000, scoped, tag = 'input window, operand 1, single buffered']
    #allocation6 [shape = 's32[1]{0}', space=sflag, size = 0x4, scoped, tag = 'scoped memory for tpu_custom_call.1']
    #allocation7 [shape = 'u8[4096]{0}', space=vmem, size = 0x1000, scoped, tag = 'input window, operand 2, single buffered']
    #allocation8 [shape = 'u8[4096]{0}', space=vmem, size = 0x1000, scoped, tag = 'output window, operand 0, single buffered']
    %8 = vsyncpa [#allocation3], 0
    %9 = vsyncpa [#allocation6], 0
    %10 = vsyncpa [#allocation4], 0
    // Predicated region
    $region2: #{tpu_custom_call.1} parent=1 // pred_check
      _
    $region3: #{tpu_custom_call.1} parent=1 // pred_check_branch
      %12 = sbr.rel (0) target = $region5
    $region4: #{tpu_custom_call.1} parent=1 // pred_region
      %s14 = ssub.s32 128, 128
      %15 = vsyncadd [#allocation3], %s14
      %s17 = sshll.u32 [#allocation2], 4
      %s18 = int_to_ptr.vmem [resolvable:$true] %s17
      %20 = dma.hbm_to_vmem [thread:$0]  %s0, 128, %s18, [#allocation3]
    $region5: #{tpu_custom_call.1} parent=1 // pred_fallthru
      _
    // Predicated region
    $region6: #{tpu_custom_call.1} parent=1 // pred_check
      _
    $region7: #{tpu_custom_call.1} parent=1 // pred_check_branch
      %22 = sbr.rel (0) target = $region9
    $region8: #{tpu_custom_call.1} parent=1 // pred_region
      %s24 = ssub.s32 12288, 12288
      %25 = vsyncadd [#allocation6], %s24
      %s26 = sshll.u32 [#allocation5], 4
      %s27 = int_to_ptr.vmem [resolvable:$true] %s26
      %32 = dma.hbm_to_vmem [thread:$0]  %s1, 12288, %s27, [#allocation6], 128, 128, 8
    $region9: #{tpu_custom_call.1} parent=1 // pred_fallthru
      _
    // Predicated region
    $region10: #{tpu_custom_call.1} parent=1 // pred_check
      _
    $region11: #{tpu_custom_call.1} parent=1 // pred_check_branch
      %34 = sbr.rel (0) target = $region13
    $region12: #{tpu_custom_call.1} parent=1 // pred_region
      %s36 = ssub.s32 128, 128
      %37 = vsyncadd [#allocation6], %s36
      %s39 = sshll.u32 [#allocation7], 4
      %s40 = int_to_ptr.vmem [resolvable:$true] %s39
      %42 = dma.hbm_to_vmem [thread:$0]  %s2, 128, %s40, [#allocation6]
    $region13: #{tpu_custom_call.1} parent=1 // pred_fallthru
      _
    // Predicated region
    $region14: #{tpu_custom_call.1} parent=1 // pred_check
      _
    $region15: #{tpu_custom_call.1} parent=1 // pred_check_branch
      %44 = sbr.rel (0) target = $region17
    $region16: #{tpu_custom_call.1} parent=1 // pred_region
      %45 = dma.done [#allocation3], 128
    $region17: #{tpu_custom_call.1} parent=1 // pred_fallthru
      _
    // Predicated region
    $region18: #{tpu_custom_call.1} parent=1 // pred_check
      _
    $region19: #{tpu_custom_call.1} parent=1 // pred_check_branch
      %47 = sbr.rel (0) target = $region21
    $region20: #{tpu_custom_call.1} parent=1 // pred_region
      %48 = dma.done [#allocation6], 12288
    $region21: #{tpu_custom_call.1} parent=1 // pred_fallthru
      _
    // Predicated region
    $region22: #{tpu_custom_call.1} parent=1 // pred_check
      _
    $region23: #{tpu_custom_call.1} parent=1 // pred_check_branch
      %50 = sbr.rel (0) target = $region25
    $region24: #{tpu_custom_call.1} parent=1 // pred_region
      %51 = dma.done [#allocation6], 128
    $region25: #{tpu_custom_call.1} parent=1 // pred_fallthru
      _
    %v52 = vld [vmem:[#allocation7] sm:$0xff]
    %v53 = vld [vmem:[#allocation2] sm:$0xff]
    %v54 = vld [vmem:[#allocation5] sm:$0xff]
    %v55 = vlaneseq
    %v56 = vshrl.u32 %v55, 7
    %v57 = vsub.s32 0, %v56
    %v58 = vrot.slane %v52, %v57
    %vm59 = vcmask 64512
    %v61 = vsel %vm59, %v53, 0
    %63 = vmatprep.subr.mxu0 0.0
    %64 = vmatpush1.msra.mxu0 0.0
    %65 = vmatprep.subr.mxu0 0.0
    %66 = vmatpush1.msra.mxu0 0.0
    %67 = vmatprep.subr.mxu0 0.0
    %68 = vmatpush1.msra.mxu0 0.0
    %69 = vmatprep.subr.mxu0 0.0
    %70 = vmatpush1.msra.mxu0 0.0
    %71 = vmatprep.subr.mxu0 0.0
    %72 = vmatpush1.msra.mxu0 0.0
    %73 = vmatprep.subr.mxu0 0.0
    %74 = vmatpush1.msra.mxu0 0.0
    %75 = vmatprep.subr.mxu0 0.0
    %76 = vmatpush1.msra.mxu0 0.0
    %77 = vmatprep.subr.mxu0 0.0
    %78 = vmatpush1.msra.mxu0 0.0
    %79 = vmatprep.subr.mxu0 0.0
    %80 = vmatpush1.msra.mxu0 0.0
    %81 = vmatprep.subr.mxu0 0.0
    %82 = vmatpush1.msra.mxu0 0.0
    %83 = vmatprep.subr.mxu0 0.0
    %84 = vmatpush1.msra.mxu0 0.0
    %85 = vmatprep.subr.mxu0 0.0
    %86 = vmatpush1.msra.mxu0 0.0
    %87 = vmatprep.subr.mxu0 0.0
    %88 = vmatpush1.msra.mxu0 0.0
    %89 = vmatprep.subr.mxu0 0.0
    %90 = vmatpush1.msra.mxu0 0.0
    %91 = vmatprep.subr.mxu0 0.0
    %92 = vmatpush1.msra.mxu0 0.0
    %93 = vmatprep.subr.mxu0 0.0
    %94 = vmatpush1.msra.mxu0 %v54
    %95 = vmatprep.subr.mxu0 0.0
    %96 = vmatpush2.msra.mxu0 0.0
    %97 = vmatprep.subr.mxu0 0.0
    %98 = vmatpush2.msra.mxu0 0.0
    %99 = vmatprep.subr.mxu0 0.0
    %100 = vmatpush2.msra.mxu0 0.0
    %101 = vmatprep.subr.mxu0 0.0
    %102 = vmatpush2.msra.mxu0 0.0
    %103 = vmatprep.subr.mxu0 0.0
    %104 = vmatpush2.msra.mxu0 0.0
    %105 = vmatprep.subr.mxu0 0.0
    %106 = vmatpush2.msra.mxu0 0.0
    %107 = vmatprep.subr.mxu0 0.0
    %108 = vmatpush2.msra.mxu0 0.0
    %109 = vmatprep.subr.mxu0 0.0
    %110 = vmatpush2.msra.mxu0 0.0
    %111 = vmatprep.subr.mxu0 0.0
    %112 = vmatpush2.msra.mxu0 0.0
    %113 = vmatprep.subr.mxu0 0.0
    %114 = vmatpush2.msra.mxu0 0.0
    %115 = vmatprep.subr.mxu0 0.0
    %116 = vmatpush2.msra.mxu0 0.0
    %117 = vmatprep.subr.mxu0 0.0
    %118 = vmatpush2.msra.mxu0 0.0
    %119 = vmatprep.subr.mxu0 0.0
    %120 = vmatpush2.msra.mxu0 0.0
    %121 = vmatprep.subr.mxu0 0.0
    %122 = vmatpush2.msra.mxu0 0.0
    %123 = vmatprep.subr.mxu0 0.0
    %124 = vmatpush2.msra.mxu0 0.0
    %125 = vmatprep.subr.mxu0 0.0
    %126 = vmatpush2.msra.mxu0 0.0
    %127 = vmatprep.mubr.f32.mxu0 0.0
    %128 = vmatmul.mubr.f32.gmra.mxu0 %v61
    %v129 = vpop.f32.mrf.mxu0
    %v130 = vadd.f32 %v58, %v129
    %v131 = vpop.f32.mrf.mxu0
    %132 = vdwg.mxu0
    %v133 = vmax.f32 %v130, 0.0
    %s134 = scalar_lea.vmem [#allocation5], 128
    %v135 = vld [vmem:[%s134] sm:$0xff]
    %v136 = vld [vmem:[%s134 + $0x8] sm:$0xff]
    %v137 = vld [vmem:[%s134 + $0x10] sm:$0xff]
    %v138 = vld [vmem:[%s134 + $0x18] sm:$0xff]
    %v139 = vld [vmem:[%s134 + $0x20] sm:$0xff]
    %v140 = vld [vmem:[%s134 + $0x28] sm:$0xff]
    %v141 = vld [vmem:[%s134 + $0x30] sm:$0xff]
    %v142 = vld [vmem:[%s134 + $0x38] sm:$0xff]
    %v143 = vld [vmem:[%s134 + $0x40] sm:$0xff]
    %v144 = vld [vmem:[%s134 + $0x48] sm:$0xff]
    %v145 = vld [vmem:[%s134 + $0x50] sm:$0xff]
    %v146 = vld [vmem:[%s134 + $0x58] sm:$0xff]
    %v147 = vld [vmem:[%s134 + $0x60] sm:$0xff]
    %v148 = vld [vmem:[%s134 + $0x68] sm:$0xff]
    %v149 = vld [vmem:[%s134 + $0x70] sm:$0xff]
    %v150 = vld [vmem:[%s134 + $0x78] sm:$0xff]
    %v151 = vlaneseq
    %v152 = vshrl.u32 %v151, 7
    %v153 = vsub.s32 1, %v152
    %v154 = vrot.slane %v52, %v153
    %155 = vmatprep.subr.mxu0 0.0
    %156 = vmatpush1.msra.mxu0 %v150
    %157 = vmatprep.subr.mxu0 0.0
    %158 = vmatpush1.msra.mxu0 %v149
    %159 = vmatprep.subr.mxu0 0.0
    %160 = vmatpush1.msra.mxu0 %v148
    %161 = vmatprep.subr.mxu0 0.0
    %162 = vmatpush1.msra.mxu0 %v147
    %163 = vmatprep.subr.mxu0 0.0
    %164 = vmatpush1.msra.mxu0 %v146
    %165 = vmatprep.subr.mxu0 0.0
    %166 = vmatpush1.msra.mxu0 %v145
    %167 = vmatprep.subr.mxu0 0.0
    %168 = vmatpush1.msra.mxu0 %v144
    %169 = vmatprep.subr.mxu0 0.0
    %170 = vmatpush1.msra.mxu0 %v143
    %171 = vmatprep.subr.mxu0 0.0
    %172 = vmatpush1.msra.mxu0 %v142
    %173 = vmatprep.subr.mxu0 0.0
    %174 = vmatpush1.msra.mxu0 %v141
    %175 = vmatprep.subr.mxu0 0.0
    %176 = vmatpush1.msra.mxu0 %v140
    %177 = vmatprep.subr.mxu0 0.0
    %178 = vmatpush1.msra.mxu0 %v139
    %179 = vmatprep.subr.mxu0 0.0
    %180 = vmatpush1.msra.mxu0 %v138
    %181 = vmatprep.subr.mxu0 0.0
    %182 = vmatpush1.msra.mxu0 %v137
    %183 = vmatprep.subr.mxu0 0.0
    %184 = vmatpush1.msra.mxu0 %v136
    %185 = vmatprep.subr.mxu0 0.0
    %186 = vmatpush1.msra.mxu0 %v135
    %187 = vmatprep.subr.mxu0 0.0
    %188 = vmatpush2.msra.mxu0 0.0
    %189 = vmatprep.subr.mxu0 0.0
    %190 = vmatpush2.msra.mxu0 0.0
    %191 = vmatprep.subr.mxu0 0.0
    %192 = vmatpush2.msra.mxu0 0.0
    %193 = vmatprep.subr.mxu0 0.0
    %194 = vmatpush2.msra.mxu0 0.0
    %195 = vmatprep.subr.mxu0 0.0
    %196 = vmatpush2.msra.mxu0 0.0
    %197 = vmatprep.subr.mxu0 0.0
    %198 = vmatpush2.msra.mxu0 0.0
    %199 = vmatprep.subr.mxu0 0.0
    %200 = vmatpush2.msra.mxu0 0.0
    %201 = vmatprep.subr.mxu0 0.0
    %202 = vmatpush2.msra.mxu0 0.0
    %203 = vmatprep.subr.mxu0 0.0
    %204 = vmatpush2.msra.mxu0 0.0
    %205 = vmatprep.subr.mxu0 0.0
    %206 = vmatpush2.msra.mxu0 0.0
    %207 = vmatprep.subr.mxu0 0.0
    %208 = vmatpush2.msra.mxu0 0.0
    %209 = vmatprep.subr.mxu0 0.0
    %210 = vmatpush2.msra.mxu0 0.0
    %211 = vmatprep.subr.mxu0 0.0
    %212 = vmatpush2.msra.mxu0 0.0
    %213 = vmatprep.subr.mxu0 0.0
    %214 = vmatpush2.msra.mxu0 0.0
    %215 = vmatprep.subr.mxu0 0.0
    %216 = vmatpush2.msra.mxu0 0.0
    %217 = vmatprep.subr.mxu0 0.0
    %218 = vmatpush2.msra.mxu0 0.0
    %219 = vmatprep.mubr.f32.mxu0 0.0
    %220 = vmatmul.mubr.f32.gmra.mxu0 %v133
    %v221 = vpop.f32.mrf.mxu0
    %v222 = vadd.f32 %v154, %v221
    %v223 = vpop.f32.mrf.mxu0
    %224 = vdwg.mxu0
    %v225 = vmax.f32 %v222, 0.0
    %s226 = scalar_lea.vmem [#allocation5], 256
    %v227 = vld [vmem:[%s226] sm:$0xff]
    %v228 = vld [vmem:[%s226 + $0x8] sm:$0xff]
    %v229 = vld [vmem:[%s226 + $0x10] sm:$0xff]
    %v230 = vld [vmem:[%s226 + $0x18] sm:$0xff]
    %v231 = vld [vmem:[%s226 + $0x20] sm:$0xff]
    %v232 = vld [vmem:[%s226 + $0x28] sm:$0xff]
    %v233 = vld [vmem:[%s226 + $0x30] sm:$0xff]
    %v234 = vld [vmem:[%s226 + $0x38] sm:$0xff]
    %v235 = vld [vmem:[%s226 + $0x40] sm:$0xff]
    %v236 = vld [vmem:[%s226 + $0x48] sm:$0xff]
    %v237 = vld [vmem:[%s226 + $0x50] sm:$0xff]
    %v238 = vld [vmem:[%s226 + $0x58] sm:$0xff]
    %v239 = vld [vmem:[%s226 + $0x60] sm:$0xff]
    %v240 = vld [vmem:[%s226 + $0x68] sm:$0xff]
    %v241 = vld [vmem:[%s226 + $0x70] sm:$0xff]
    %v242 = vld [vmem:[%s226 + $0x78] sm:$0xff]
    %v243 = vlaneseq
    %v244 = vshrl.u32 %v243, 7
    %v245 = vsub.s32 2, %v244
    %v246 = vrot.slane %v52, %v245
    %247 = vmatprep.subr.mxu0 0.0
    %248 = vmatpush1.msra.mxu0 %v242
    %249 = vmatprep.subr.mxu0 0.0
    %250 = vmatpush1.msra.mxu0 %v241
    %251 = vmatprep.subr.mxu0 0.0
    %252 = vmatpush1.msra.mxu0 %v240
    %253 = vmatprep.subr.mxu0 0.0
    %254 = vmatpush1.msra.mxu0 %v239
    %255 = vmatprep.subr.mxu0 0.0
    %256 = vmatpush1.msra.mxu0 %v238
    %257 = vmatprep.subr.mxu0 0.0
    %258 = vmatpush1.msra.mxu0 %v237
    %259 = vmatprep.subr.mxu0 0.0
    %260 = vmatpush1.msra.mxu0 %v236
    %261 = vmatprep.subr.mxu0 0.0
    %262 = vmatpush1.msra.mxu0 %v235
    %263 = vmatprep.subr.mxu0 0.0
    %264 = vmatpush1.msra.mxu0 %v234
    %265 = vmatprep.subr.mxu0 0.0
    %266 = vmatpush1.msra.mxu0 %v233
    %267 = vmatprep.subr.mxu0 0.0
    %268 = vmatpush1.msra.mxu0 %v232
    %269 = vmatprep.subr.mxu0 0.0
    %270 = vmatpush1.msra.mxu0 %v231
    %271 = vmatprep.subr.mxu0 0.0
    %272 = vmatpush1.msra.mxu0 %v230
    %273 = vmatprep.subr.mxu0 0.0
    %274 = vmatpush1.msra.mxu0 %v229
    %275 = vmatprep.subr.mxu0 0.0
    %276 = vmatpush1.msra.mxu0 %v228
    %277 = vmatprep.subr.mxu0 0.0
    %278 = vmatpush1.msra.mxu0 %v227
    %279 = vmatprep.subr.mxu0 0.0
    %280 = vmatpush2.msra.mxu0 0.0
    %281 = vmatprep.subr.mxu0 0.0
    %282 = vmatpush2.msra.mxu0 0.0
    %283 = vmatprep.subr.mxu0 0.0
    %284 = vmatpush2.msra.mxu0 0.0
    %285 = vmatprep.subr.mxu0 0.0
    %286 = vmatpush2.msra.mxu0 0.0
    %287 = vmatprep.subr.mxu0 0.0
    %288 = vmatpush2.msra.mxu0 0.0
    %289 = vmatprep.subr.mxu0 0.0
    %290 = vmatpush2.msra.mxu0 0.0
    %291 = vmatprep.subr.mxu0 0.0
    %292 = vmatpush2.msra.mxu0 0.0
    %293 = vmatprep.subr.mxu0 0.0
    %294 = vmatpush2.msra.mxu0 0.0
    %295 = vmatprep.subr.mxu0 0.0
    %296 = vmatpush2.msra.mxu0 0.0
    %297 = vmatprep.subr.mxu0 0.0
    %298 = vmatpush2.msra.mxu0 0.0
    %299 = vmatprep.subr.mxu0 0.0
    %300 = vmatpush2.msra.mxu0 0.0
    %301 = vmatprep.subr.mxu0 0.0
    %302 = vmatpush2.msra.mxu0 0.0
    %303 = vmatprep.subr.mxu0 0.0
    %304 = vmatpush2.msra.mxu0 0.0
    %305 = vmatprep.subr.mxu0 0.0
    %306 = vmatpush2.msra.mxu0 0.0
    %307 = vmatprep.subr.mxu0 0.0
    %308 = vmatpush2.msra.mxu0 0.0
    %309 = vmatprep.subr.mxu0 0.0
    %310 = vmatpush2.msra.mxu0 0.0
    %311 = vmatprep.mubr.f32.mxu0 0.0
    %312 = vmatmul.mubr.f32.gmra.mxu0 %v225
    %v313 = vpop.f32.mrf.mxu0
    %v314 = vadd.f32 %v246, %v313
    %v315 = vpop.f32.mrf.mxu0
    %316 = vdwg.mxu0
    %v317 = vmax.f32 %v314, 0.0
    %s318 = scalar_lea.vmem [#allocation5], 384
    %v319 = vld [vmem:[%s318] sm:$0xff]
    %v320 = vld [vmem:[%s318 + $0x8] sm:$0xff]
    %v321 = vld [vmem:[%s318 + $0x10] sm:$0xff]
    %v322 = vld [vmem:[%s318 + $0x18] sm:$0xff]
    %v323 = vld [vmem:[%s318 + $0x20] sm:$0xff]
    %v324 = vld [vmem:[%s318 + $0x28] sm:$0xff]
    %v325 = vld [vmem:[%s318 + $0x30] sm:$0xff]
    %v326 = vld [vmem:[%s318 + $0x38] sm:$0xff]
    %v327 = vld [vmem:[%s318 + $0x40] sm:$0xff]
    %v328 = vld [vmem:[%s318 + $0x48] sm:$0xff]
    %v329 = vld [vmem:[%s318 + $0x50] sm:$0xff]
    %v330 = vld [vmem:[%s318 + $0x58] sm:$0xff]
    %v331 = vld [vmem:[%s318 + $0x60] sm:$0xff]
    %v332 = vld [vmem:[%s318 + $0x68] sm:$0xff]
    %v333 = vld [vmem:[%s318 + $0x70] sm:$0xff]
    %v334 = vld [vmem:[%s318 + $0x78] sm:$0xff]
    %v335 = vlaneseq
    %v336 = vshrl.u32 %v335, 7
    %v337 = vsub.s32 3, %v336
    %v338 = vrot.slane %v52, %v337
    %339 = vmatprep.subr.mxu0 0.0
    %340 = vmatpush1.msra.mxu0 %v334
    %341 = vmatprep.subr.mxu0 0.0
    %342 = vmatpush1.msra.mxu0 %v333
    %343 = vmatprep.subr.mxu0 0.0
    %344 = vmatpush1.msra.mxu0 %v332
    %345 = vmatprep.subr.mxu0 0.0
    %346 = vmatpush1.msra.mxu0 %v331
    %347 = vmatprep.subr.mxu0 0.0
    %348 = vmatpush1.msra.mxu0 %v330
    %349 = vmatprep.subr.mxu0 0.0
    %350 = vmatpush1.msra.mxu0 %v329
    %351 = vmatprep.subr.mxu0 0.0
    %352 = vmatpush1.msra.mxu0 %v328
    %353 = vmatprep.subr.mxu0 0.0
    %354 = vmatpush1.msra.mxu0 %v327
    %355 = vmatprep.subr.mxu0 0.0
    %356 = vmatpush1.msra.mxu0 %v326
    %357 = vmatprep.subr.mxu0 0.0
    %358 = vmatpush1.msra.mxu0 %v325
    %359 = vmatprep.subr.mxu0 0.0
    %360 = vmatpush1.msra.mxu0 %v324
    %361 = vmatprep.subr.mxu0 0.0
    %362 = vmatpush1.msra.mxu0 %v323
    %363 = vmatprep.subr.mxu0 0.0
    %364 = vmatpush1.msra.mxu0 %v322
    %365 = vmatprep.subr.mxu0 0.0
    %366 = vmatpush1.msra.mxu0 %v321
    %367 = vmatprep.subr.mxu0 0.0
    %368 = vmatpush1.msra.mxu0 %v320
    %369 = vmatprep.subr.mxu0 0.0
    %370 = vmatpush1.msra.mxu0 %v319
    %371 = vmatprep.subr.mxu0 0.0
    %372 = vmatpush2.msra.mxu0 0.0
    %373 = vmatprep.subr.mxu0 0.0
    %374 = vmatpush2.msra.mxu0 0.0
    %375 = vmatprep.subr.mxu0 0.0
    %376 = vmatpush2.msra.mxu0 0.0
    %377 = vmatprep.subr.mxu0 0.0
    %378 = vmatpush2.msra.mxu0 0.0
    %379 = vmatprep.subr.mxu0 0.0
    %380 = vmatpush2.msra.mxu0 0.0
    %381 = vmatprep.subr.mxu0 0.0
    %382 = vmatpush2.msra.mxu0 0.0
    %383 = vmatprep.subr.mxu0 0.0
    %384 = vmatpush2.msra.mxu0 0.0
    %385 = vmatprep.subr.mxu0 0.0
    %386 = vmatpush2.msra.mxu0 0.0
    %387 = vmatprep.subr.mxu0 0.0
    %388 = vmatpush2.msra.mxu0 0.0
    %389 = vmatprep.subr.mxu0 0.0
    %390 = vmatpush2.msra.mxu0 0.0
    %391 = vmatprep.subr.mxu0 0.0
    %392 = vmatpush2.msra.mxu0 0.0
    %393 = vmatprep.subr.mxu0 0.0
    %394 = vmatpush2.msra.mxu0 0.0
    %395 = vmatprep.subr.mxu0 0.0
    %396 = vmatpush2.msra.mxu0 0.0
    %397 = vmatprep.subr.mxu0 0.0
    %398 = vmatpush2.msra.mxu0 0.0
    %399 = vmatprep.subr.mxu0 0.0
    %400 = vmatpush2.msra.mxu0 0.0
    %401 = vmatprep.subr.mxu0 0.0
    %402 = vmatpush2.msra.mxu0 0.0
    %403 = vmatprep.mubr.f32.mxu0 0.0
    %404 = vmatmul.mubr.f32.gmra.mxu0 %v317
    %v405 = vpop.f32.mrf.mxu0
    %v406 = vadd.f32 %v338, %v405
    %v407 = vpop.f32.mrf.mxu0
    %408 = vdwg.mxu0
    %v409 = vmax.f32 %v406, 0.0
    %s410 = scalar_lea.vmem [#allocation5], 512
    %v411 = vld [vmem:[%s410] sm:$0xff]
    %v412 = vld [vmem:[%s410 + $0x8] sm:$0xff]
    %v413 = vld [vmem:[%s410 + $0x10] sm:$0xff]
    %v414 = vld [vmem:[%s410 + $0x18] sm:$0xff]
    %v415 = vld [vmem:[%s410 + $0x20] sm:$0xff]
    %v416 = vld [vmem:[%s410 + $0x28] sm:$0xff]
    %v417 = vld [vmem:[%s410 + $0x30] sm:$0xff]
    %v418 = vld [vmem:[%s410 + $0x38] sm:$0xff]
    %v419 = vld [vmem:[%s410 + $0x40] sm:$0xff]
    %v420 = vld [vmem:[%s410 + $0x48] sm:$0xff]
    %v421 = vld [vmem:[%s410 + $0x50] sm:$0xff]
    %v422 = vld [vmem:[%s410 + $0x58] sm:$0xff]
    %v423 = vld [vmem:[%s410 + $0x60] sm:$0xff]
    %v424 = vld [vmem:[%s410 + $0x68] sm:$0xff]
    %v425 = vld [vmem:[%s410 + $0x70] sm:$0xff]
    %v426 = vld [vmem:[%s410 + $0x78] sm:$0xff]
    %v427 = vlaneseq
    %v428 = vshrl.u32 %v427, 7
    %v429 = vsub.s32 4, %v428
    %v430 = vrot.slane %v52, %v429
    %431 = vmatprep.subr.mxu0 0.0
    %432 = vmatpush1.msra.mxu0 %v426
    %433 = vmatprep.subr.mxu0 0.0
    %434 = vmatpush1.msra.mxu0 %v425
    %435 = vmatprep.subr.mxu0 0.0
    %436 = vmatpush1.msra.mxu0 %v424
    %437 = vmatprep.subr.mxu0 0.0
    %438 = vmatpush1.msra.mxu0 %v423
    %439 = vmatprep.subr.mxu0 0.0
    %440 = vmatpush1.msra.mxu0 %v422
    %441 = vmatprep.subr.mxu0 0.0
    %442 = vmatpush1.msra.mxu0 %v421
    %443 = vmatprep.subr.mxu0 0.0
    %444 = vmatpush1.msra.mxu0 %v420
    %445 = vmatprep.subr.mxu0 0.0
    %446 = vmatpush1.msra.mxu0 %v419
    %447 = vmatprep.subr.mxu0 0.0
    %448 = vmatpush1.msra.mxu0 %v418
    %449 = vmatprep.subr.mxu0 0.0
    %450 = vmatpush1.msra.mxu0 %v417
    %451 = vmatprep.subr.mxu0 0.0
    %452 = vmatpush1.msra.mxu0 %v416
    %453 = vmatprep.subr.mxu0 0.0
    %454 = vmatpush1.msra.mxu0 %v415
    %455 = vmatprep.subr.mxu0 0.0
    %456 = vmatpush1.msra.mxu0 %v414
    %457 = vmatprep.subr.mxu0 0.0
    %458 = vmatpush1.msra.mxu0 %v413
    %459 = vmatprep.subr.mxu0 0.0
    %460 = vmatpush1.msra.mxu0 %v412
    %461 = vmatprep.subr.mxu0 0.0
    %462 = vmatpush1.msra.mxu0 %v411
    %463 = vmatprep.subr.mxu0 0.0
    %464 = vmatpush2.msra.mxu0 0.0
    %465 = vmatprep.subr.mxu0 0.0
    %466 = vmatpush2.msra.mxu0 0.0
    %467 = vmatprep.subr.mxu0 0.0
    %468 = vmatpush2.msra.mxu0 0.0
    %469 = vmatprep.subr.mxu0 0.0
    %470 = vmatpush2.msra.mxu0 0.0
    %471 = vmatprep.subr.mxu0 0.0
    %472 = vmatpush2.msra.mxu0 0.0
    %473 = vmatprep.subr.mxu0 0.0
    %474 = vmatpush2.msra.mxu0 0.0
    %475 = vmatprep.subr.mxu0 0.0
    %476 = vmatpush2.msra.mxu0 0.0
    %477 = vmatprep.subr.mxu0 0.0
    %478 = vmatpush2.msra.mxu0 0.0
    %479 = vmatprep.subr.mxu0 0.0
    %480 = vmatpush2.msra.mxu0 0.0
    %481 = vmatprep.subr.mxu0 0.0
    %482 = vmatpush2.msra.mxu0 0.0
    %483 = vmatprep.subr.mxu0 0.0
    %484 = vmatpush2.msra.mxu0 0.0
    %485 = vmatprep.subr.mxu0 0.0
    %486 = vmatpush2.msra.mxu0 0.0
    %487 = vmatprep.subr.mxu0 0.0
    %488 = vmatpush2.msra.mxu0 0.0
    %489 = vmatprep.subr.mxu0 0.0
    %490 = vmatpush2.msra.mxu0 0.0
    %491 = vmatprep.subr.mxu0 0.0
    %492 = vmatpush2.msra.mxu0 0.0
    %493 = vmatprep.subr.mxu0 0.0
    %494 = vmatpush2.msra.mxu0 0.0
    %495 = vmatprep.mubr.f32.mxu0 0.0
    %496 = vmatmul.mubr.f32.gmra.mxu0 %v409
    %v497 = vpop.f32.mrf.mxu0
    %v498 = vadd.f32 %v430, %v497
    %v499 = vpop.f32.mrf.mxu0
    %500 = vdwg.mxu0
    %v501 = vmax.f32 %v498, 0.0
    %s502 = scalar_lea.vmem [#allocation5], 640
    %v503 = vld [vmem:[%s502] sm:$0xff]
    %v504 = vld [vmem:[%s502 + $0x8] sm:$0xff]
    %v505 = vld [vmem:[%s502 + $0x10] sm:$0xff]
    %v506 = vld [vmem:[%s502 + $0x18] sm:$0xff]
    %v507 = vld [vmem:[%s502 + $0x20] sm:$0xff]
    %v508 = vld [vmem:[%s502 + $0x28] sm:$0xff]
    %v509 = vld [vmem:[%s502 + $0x30] sm:$0xff]
    %v510 = vld [vmem:[%s502 + $0x38] sm:$0xff]
    %v511 = vld [vmem:[%s502 + $0x40] sm:$0xff]
    %v512 = vld [vmem:[%s502 + $0x48] sm:$0xff]
    %v513 = vld [vmem:[%s502 + $0x50] sm:$0xff]
    %v514 = vld [vmem:[%s502 + $0x58] sm:$0xff]
    %v515 = vld [vmem:[%s502 + $0x60] sm:$0xff]
    %v516 = vld [vmem:[%s502 + $0x68] sm:$0xff]
    %v517 = vld [vmem:[%s502 + $0x70] sm:$0xff]
    %v518 = vld [vmem:[%s502 + $0x78] sm:$0xff]
    %v519 = vlaneseq
    %v520 = vshrl.u32 %v519, 7
    %v521 = vsub.s32 5, %v520
    %v522 = vrot.slane %v52, %v521
    %523 = vmatprep.subr.mxu0 0.0
    %524 = vmatpush1.msra.mxu0 %v518
    %525 = vmatprep.subr.mxu0 0.0
    %526 = vmatpush1.msra.mxu0 %v517
    %527 = vmatprep.subr.mxu0 0.0
    %528 = vmatpush1.msra.mxu0 %v516
    %529 = vmatprep.subr.mxu0 0.0
    %530 = vmatpush1.msra.mxu0 %v515
    %531 = vmatprep.subr.mxu0 0.0
    %532 = vmatpush1.msra.mxu0 %v514
    %533 = vmatprep.subr.mxu0 0.0
    %534 = vmatpush1.msra.mxu0 %v513
    %535 = vmatprep.subr.mxu0 0.0
    %536 = vmatpush1.msra.mxu0 %v512
    %537 = vmatprep.subr.mxu0 0.0
    %538 = vmatpush1.msra.mxu0 %v511
    %539 = vmatprep.subr.mxu0 0.0
    %540 = vmatpush1.msra.mxu0 %v510
    %541 = vmatprep.subr.mxu0 0.0
    %542 = vmatpush1.msra.mxu0 %v509
    %543 = vmatprep.subr.mxu0 0.0
    %544 = vmatpush1.msra.mxu0 %v508
    %545 = vmatprep.subr.mxu0 0.0
    %546 = vmatpush1.msra.mxu0 %v507
    %547 = vmatprep.subr.mxu0 0.0
    %548 = vmatpush1.msra.mxu0 %v506
    %549 = vmatprep.subr.mxu0 0.0
    %550 = vmatpush1.msra.mxu0 %v505
    %551 = vmatprep.subr.mxu0 0.0
    %552 = vmatpush1.msra.mxu0 %v504
    %553 = vmatprep.subr.mxu0 0.0
    %554 = vmatpush1.msra.mxu0 %v503
    %555 = vmatprep.subr.mxu0 0.0
    %556 = vmatpush2.msra.mxu0 0.0
    %557 = vmatprep.subr.mxu0 0.0
    %558 = vmatpush2.msra.mxu0 0.0
    %559 = vmatprep.subr.mxu0 0.0
    %560 = vmatpush2.msra.mxu0 0.0
    %561 = vmatprep.subr.mxu0 0.0
    %562 = vmatpush2.msra.mxu0 0.0
    %563 = vmatprep.subr.mxu0 0.0
    %564 = vmatpush2.msra.mxu0 0.0
    %565 = vmatprep.subr.mxu0 0.0
    %566 = vmatpush2.msra.mxu0 0.0
    %567 = vmatprep.subr.mxu0 0.0
    %568 = vmatpush2.msra.mxu0 0.0
    %569 = vmatprep.subr.mxu0 0.0
    %570 = vmatpush2.msra.mxu0 0.0
    %571 = vmatprep.subr.mxu0 0.0
    %572 = vmatpush2.msra.mxu0 0.0
    %573 = vmatprep.subr.mxu0 0.0
    %574 = vmatpush2.msra.mxu0 0.0
    %575 = vmatprep.subr.mxu0 0.0
    %576 = vmatpush2.msra.mxu0 0.0
    %577 = vmatprep.subr.mxu0 0.0
    %578 = vmatpush2.msra.mxu0 0.0
    %579 = vmatprep.subr.mxu0 0.0
    %580 = vmatpush2.msra.mxu0 0.0
    %581 = vmatprep.subr.mxu0 0.0
    %582 = vmatpush2.msra.mxu0 0.0
    %583 = vmatprep.subr.mxu0 0.0
    %584 = vmatpush2.msra.mxu0 0.0
    %585 = vmatprep.subr.mxu0 0.0
    %586 = vmatpush2.msra.mxu0 0.0
    %587 = vmatprep.mubr.f32.mxu0 0.0
    %588 = vmatmul.mubr.f32.gmra.mxu0 %v501
    %v589 = vpop.f32.mrf.mxu0
    %v590 = vadd.f32 %v522, %v589
    %v591 = vpop.f32.mrf.mxu0
    %592 = vdwg.mxu0
    %593 = vst [vmem:[#allocation8] sm:$0xff] %v590
    // Predicated region
    $region26: #{tpu_custom_call.1} parent=1 // pred_check
      _
    $region27: #{tpu_custom_call.1} parent=1 // pred_check_branch
      %595 = sbr.rel (0) target = $region29
    $region28: #{tpu_custom_call.1} parent=1 // pred_region
      %s597 = ssub.s32 128, 128
      %598 = vsyncadd [#allocation4], %s597
      %s600 = sshll.u32 [#allocation8], 4
      %s601 = int_to_ptr.vmem [resolvable:$true] %s600
      %603 = dma.vmem_to_hbm [thread:$0]  %s601, 128, %s3, [#allocation4]
    $region29: #{tpu_custom_call.1} parent=1 // pred_fallthru
      _
    // Predicated region
    $region30: #{tpu_custom_call.1} parent=1 // pred_check
      _
    $region31: #{tpu_custom_call.1} parent=1 // pred_check_branch
      %605 = sbr.rel (0) target = $region33
    $region32: #{tpu_custom_call.1} parent=1 // pred_region
      %606 = dma.done [#allocation4], 128
    $region33: #{tpu_custom_call.1} parent=1 // pred_fallthru
      _
    %607 = vsyncpa [#allocation3], 1
    %608 = vsyncpa [#allocation6], 1
    %609 = vsyncpa [#allocation4], 1

</llo_original>
